<compile_context>
chip_gen: v7x
topology: tpu7x:2x2x1
jax: 0.10.0
libtpu: 0.0.40
codegen_flags: <defaults>
</compile_context>

<pallas_src>
import functools

import jax
import jax.numpy as jnp
from jax.experimental import pallas as pl
from jax.experimental.pallas import tpu as pltpu

LANE = 128


# ----------------------------------------------------------------------------
# Kernels
# ----------------------------------------------------------------------------
def _conv1d_rows_kernel(x_ref, w_ref, o_ref, *, dilation: int, ksize: int):
    """Narrow-L path.  x_ref: (tn, L_in_pad), w_ref: (K,) SMEM, o_ref: (tn, 128)."""
    l_out = o_ref.shape[-1]
    taps = [w_ref[k] for k in range(ksize)]          # hoisted scalar reads
    acc = taps[0] * x_ref[:, 0:l_out].astype(jnp.float32)
    for k in range(1, ksize):
        s = k * dilation
        acc = acc + taps[k] * x_ref[:, s:s + l_out].astype(jnp.float32)
    o_ref[...] = acc.astype(o_ref.dtype)


def _conv1d_chunked_kernel(x_ref, h_ref, w_ref, o_ref, *, dilation: int, ksize: int):
    """Wide-L path (L chunked with a 128-column halo stream).

    x_ref: (tn, tl)   main input window (input cols [j*tl, j*tl + tl))
    h_ref: (tn, 128)  next 128-lane block (halo; clamped at the array edge)
    w_ref: (K,)       SMEM scalar taps
    o_ref: (tn, tl)   output chunk (output cols [j*tl, j*tl + tl))
    """
    tl = o_ref.shape[-1]
    taps = [w_ref[k] for k in range(ksize)]          # hoisted scalar reads
    main_w = tl - LANE

    # Columns [0, tl-128): every tap stays inside the main window.
    if main_w > 0:
        acc = taps[0] * x_ref[:, 0:main_w].astype(jnp.float32)
        for k in range(1, ksize):
            s = k * dilation
            acc = acc + taps[k] * x_ref[:, s:s + main_w].astype(jnp.float32)
        o_ref[:, 0:main_w] = acc.astype(o_ref.dtype)

    # Last 128 columns: taps may spill into the first halo columns.
    tail = jnp.concatenate(
        [x_ref[:, main_w:tl].astype(jnp.float32),
         h_ref[...].astype(jnp.float32)],
        axis=-1)                                     # (tn, 256), lane-aligned concat
    acc_t = taps[0] * tail[:, 0:LANE]
    for k in range(1, ksize):
        s = k * dilation
        acc_t = acc_t + taps[k] * tail[:, s:s + LANE]
    o_ref[:, main_w:tl] = acc_t.astype(o_ref.dtype)


# ----------------------------------------------------------------------------
# Wrapper
# ----------------------------------------------------------------------------
def _vmem_budget():
    """Generation-aware VMEM working-set budget + scoped limit (bytes)."""
    try:
        cap = int(pltpu.get_tpu_info().vmem_capacity_bytes)
    except Exception:
        cap = 64 * 1024 * 1024                       # conservative (v7x-sized) fallback
    budget = min(48 * 1024 * 1024, (cap * 6) // 10)  # ~48 MiB on v5e/v6e, ~38 MiB on v7x
    limit = int(min(cap - 8 * 1024 * 1024, budget + 16 * 1024 * 1024))
    limit = max(limit, 32 * 1024 * 1024)
    return budget, limit


def conv1d_dilation(x, w, *, dilation: int = 2):
    """x: (N, 1, L), w: (1, 1, K)  ->  (N, 1, L_out).  f32 / bf16 in, f32 accumulate."""
    n, c_in, l = x.shape
    assert c_in == 1, "module has in_channels=1"
    k = w.shape[-1]
    halo = dilation * (k - 1)
    assert 0 < halo <= LANE, "halo must fit in one 128-lane block"
    assert l > halo, f"input length {l} too short for kernel_size={k}, dilation={dilation}"
    l_out = l - halo

    # dtype handling (perf review correctness note): sublane multiple is dtype-dependent.
    if x.dtype == jnp.bfloat16:
        sub = 16
    elif x.dtype == jnp.float32:
        sub = 8
    else:
        x = x.astype(jnp.float32)
        sub = 8
    itemsize = x.dtype.itemsize
    per_elem = 4 * itemsize + 8                      # dbl-buf in+out, f32 acc, slack

    budget, vmem_limit = _vmem_budget()
    x2 = x.reshape(n, l)
    w1 = w.reshape(k).astype(jnp.float32)

    if l_out < LANE:
        # ---------------- narrow path (tiny L, e.g. the module's L=16) --------------
        l_out_pad = LANE
        l_in_pad = pl.cdiv(l_out_pad + halo, LANE) * LANE
        per_row = (l_in_pad + l_out_pad) * per_elem
        tn_cap = max(sub, min(1024, (budget // per_row) // sub * sub))
        tn = min(tn_cap, pl.cdiv(n, sub) * sub)      # clamp to the real batch
        n_pad = pl.cdiv(n, tn) * tn

        x2p = jnp.pad(x2, ((0, n_pad - n), (0, l_in_pad - l)))   # tiny arrays only
        kernel = functools.partial(_conv1d_rows_kernel, dilation=dilation, ksize=k)
        out2 = pl.pallas_call(
            kernel,
            out_shape=jax.ShapeDtypeStruct((n_pad, l_out_pad), x2.dtype),
            grid=(n_pad // tn,),
            in_specs=[
                pl.BlockSpec((tn, l_in_pad), lambda i: (i, 0)),
                pl.BlockSpec(memory_space=pltpu.MemorySpace.SMEM),
            ],
            out_specs=pl.BlockSpec((tn, l_out_pad), lambda i: (i, 0)),
            compiler_params=pltpu.CompilerParams(
                dimension_semantics=("parallel",),
                vmem_limit_bytes=vmem_limit,
            ),
        )(x2p, w1)
        return out2[:n, :l_out].reshape(n, 1, l_out)

    # ---------------- wide path (L_out >= 128): halo-tiled, no L pad ----------------
    if n < sub:                                       # only tiny batches pay a row pad
        x2 = jnp.pad(x2, ((0, sub - n), (0, 0)))
    n_rows = x2.shape[0]

    max_elems = max(budget // per_elem, sub * LANE)
    l_out_pad = pl.cdiv(l_out, LANE) * LANE
    tl = min(l_out_pad, (l // LANE) * LANE, 32 * 1024)           # <=32K-lane chunks
    tl = max(LANE, min(tl, (max_elems // sub) // LANE * LANE))
    tn = max(sub, min((n_rows // sub) * sub, 512,
                      (max_elems // tl) // sub * sub))
    grid = (pl.cdiv(n_rows, tn), pl.cdiv(l_out, tl))

    chunk_blks = tl // LANE
    max_hblk = pl.cdiv(l, LANE) - 1                   # keep halo block inside the array;
                                                      # clamped taps only feed dropped cols

    kernel = functools.partial(_conv1d_chunked_kernel, dilation=dilation, ksize=k)
    out2 = pl.pallas_call(
        kernel,
        out_shape=jax.ShapeDtypeStruct((n_rows, l_out), x2.dtype),
        grid=grid,
        in_specs=[
            pl.BlockSpec((tn, tl), lambda i, j: (i, j)),
            pl.BlockSpec((tn, LANE),
                         lambda i, j: (i, jnp.minimum((j + 1) * chunk_blks, max_hblk))),
            pl.BlockSpec(memory_space=pltpu.MemorySpace.SMEM),
        ],
        out_specs=pl.BlockSpec((tn, tl), lambda i, j: (i, j)),
        compiler_params=pltpu.CompilerParams(
            dimension_semantics=("parallel", "parallel"),
            vmem_limit_bytes=vmem_limit,
        ),
    )(x2, x2, w1)

    if n_rows != n:
        out2 = out2[:n]
    return out2.reshape(n, 1, l_out)


# ----------------------------------------------------------------------------
# Self-test
# ----------------------------------------------------------------------------
if __name__ == "__main__":
    key = jax.random.PRNGKey(0)

    # Small shapes consistent with the module: batch=2, channels=1, length=16.
    N, C, L = 2, 1, 16
    x = jax.random.normal(key, (N, C, L), dtype=jnp.float32)

    # Deterministic init matching init_weights(): all weights = 2.0, no bias.
    dil, K = 2, 3
    w = jnp.full((1, 1, K), 2.0, dtype=jnp.float32)

    y = conv1d_dilation(x, w, dilation=dil)
    jax.block_until_ready(y)

    # Plain-JAX reference of the dilated conv (cross-correlation).
    L_out = L - dil * (K - 1)
    ref = sum(w[0, 0, k] * x[:, :, k * dil:k * dil + L_out] for k in range(K))
    assert y.shape == (N, 1, L_out), y.shape
    assert jnp.allclose(y, ref, atol=1e-5, rtol=1e-5)

    print("KERNEL_OK")
</pallas_src>

<mosaic_0001>
module attributes {stable_mosaic.version = 11 : i64} {
  func.func @_conv1d_rows_kernel(%arg0: i32, %arg1: memref<8x256xf32, #tpu.memory_space<vmem>>, %arg2: memref<3xf32, #tpu.memory_space<smem>>, %arg3: memref<8x128xf32, #tpu.memory_space<vmem>>) attributes {dimension_semantics = [#tpu.dimension_semantics<parallel>], iteration_bounds = array<i64: 1>, scalar_prefetch = 0 : i64, scratch_operands = 0 : i64, tpu.core_type = #tpu.core_type<tc>, window_params = [{transform_indices = @transform_0, window_bounds = array<i64: 8, 256>}, {transform_indices = @transform_1, window_bounds = array<i64: 3>}, {transform_indices = @transform_2, window_bounds = array<i64: 8, 128>}]} {
    %c0 = arith.constant 0 : index
    %0 = memref.load %arg2[%c0] : memref<3xf32, #tpu.memory_space<smem>>
    %c1 = arith.constant 1 : index
    %1 = memref.load %arg2[%c1] : memref<3xf32, #tpu.memory_space<smem>>
    %c2 = arith.constant 2 : index
    %2 = memref.load %arg2[%c2] : memref<3xf32, #tpu.memory_space<smem>>
    %c0_0 = arith.constant 0 : index
    %c0_1 = arith.constant 0 : index
    %3 = vector.load %arg1[%c0_0, %c0_1] : memref<8x256xf32, #tpu.memory_space<vmem>>, vector<8x128xf32>
    %4 = vector.broadcast %0 : f32 to vector<8x128xf32>
    %5 = arith.mulf %4, %3 : vector<8x128xf32>
    %c0_2 = arith.constant 0 : index
    %c2_3 = arith.constant 2 : index
    %6 = vector.load %arg1[%c0_2, %c2_3] : memref<8x256xf32, #tpu.memory_space<vmem>>, vector<8x128xf32>
    %7 = vector.broadcast %1 : f32 to vector<8x128xf32>
    %8 = arith.mulf %7, %6 : vector<8x128xf32>
    %9 = arith.addf %5, %8 : vector<8x128xf32>
    %c0_4 = arith.constant 0 : index
    %c4 = arith.constant 4 : index
    %10 = vector.load %arg1[%c0_4, %c4] : memref<8x256xf32, #tpu.memory_space<vmem>>, vector<8x128xf32>
    %11 = vector.broadcast %2 : f32 to vector<8x128xf32>
    %12 = arith.mulf %11, %10 : vector<8x128xf32>
    %13 = arith.addf %9, %12 : vector<8x128xf32>
    %c0_5 = arith.constant 0 : index
    %c0_6 = arith.constant 0 : index
    %14 = vector.load %arg3[%c0_5, %c0_6] : memref<8x128xf32, #tpu.memory_space<vmem>>, vector<8x128xf32>
    tpu.vector_store %arg3[%c0_5, %c0_6], %13 {strides = array<i32>} : memref<8x128xf32, #tpu.memory_space<vmem>>, vector<8x128xf32>,
    return
  }
  func.func @transform_0(%arg0: i32) -> (i32, i32) {
    %c0_i32 = arith.constant 0 : i32
    %c0_i32_0 = arith.constant 0 : i32
    return %arg0, %c0_i32 : i32, i32
  }
  func.func @transform_1(%arg0: i32) -> i32 {
    %c0_i32 = arith.constant 0 : i32
    %c0_i32_0 = arith.constant 0 : i32
    return %c0_i32 : i32
  }
  func.func @transform_2(%arg0: i32) -> (i32, i32) {
    %c0_i32 = arith.constant 0 : i32
    %c0_i32_0 = arith.constant 0 : i32
    return %arg0, %c0_i32 : i32, i32
  }
}

</mosaic_0001>

<llo_original>
// kernel: tpu_custom_call.1
$region0: #{tpu_custom_call.1}
  #allocation0 [shape = 'u32[]', space=smem, size = 0x4, offset = 0x4, fixed_abs, tag = 'smem constant byte address 0x4 - core index']
  #allocation1 [shape = 'u32[144,128]{1,0:T(1,128)}', space=vmem, size = 0x12000, scoped, tag = 'internal scratch']
  %s0 = inlined_call_operand.hbm [shape: f32[8,256], index: 0, kind: input, shape index: {}]
  %s1 = inlined_call_operand.vmem [shape: f32[3], index: 1, kind: input, shape index: {}]
  %s2 = inlined_call_operand.hbm [shape: f32[8,128], index: 2, kind: output, shape index: {}]
  %s3 = sld [smem:[#allocation0]]
  $region26: #{tpu_custom_call.1} parent=0
    _
  %s5 = ssub.s32 1, %s3
  %s6 = scalar_select 0, %s5, %s3
  $region1: #{tpu_custom_call.1} parent=0
    #allocation2 [shape = 'u8[8192]{0}', space=vmem, size = 0x2000, scoped, tag = 'input window, operand 0, single buffered']
    #allocation3 [shape = 's32[1]{0}', space=sflag, size = 0x4, scoped, tag = 'scoped memory for tpu_custom_call.1']
    #allocation4 [shape = 's32[1]{0}', space=sflag, size = 0x4, scoped, tag = 'scoped memory for tpu_custom_call.1']
    #allocation5 [shape = 's32[1]{0}', space=sflag, size = 0x4, scoped, tag = 'scoped memory for tpu_custom_call.1']
    #allocation6 [shape = 'u8[512]{0}', space=smem, size = 0x200, scoped, tag = 'input window, operand 1, single buffered']
    #allocation7 [shape = 'u8[4096]{0}', space=vmem, size = 0x1000, scoped, tag = 'output window, operand 0, single buffered']
    %7 = vsyncpa [#allocation3], 0
    %8 = vsyncpa [#allocation5], 0
    %9 = vsyncpa [#allocation4], 0
    // Predicated region
    $region2: #{tpu_custom_call.1} parent=1 // pred_check
      _
    $region3: #{tpu_custom_call.1} parent=1 // pred_check_branch
      %11 = sbr.rel (0) target = $region5
    $region4: #{tpu_custom_call.1} parent=1 // pred_region
      %s13 = ssub.s32 256, 256
      %14 = vsyncadd [#allocation3], %s13
      %s16 = sshll.u32 [#allocation2], 4
      %s17 = int_to_ptr.vmem [resolvable:$true] %s16
      %19 = dma.hbm_to_vmem [thread:$0]  %s0, 256, %s17, [#allocation3]
    $region5: #{tpu_custom_call.1} parent=1 // pred_fallthru
      _
    // Predicated region
    $region6: #{tpu_custom_call.1} parent=1 // pred_check
      _
    $region7: #{tpu_custom_call.1} parent=1 // pred_check_branch
      %21 = sbr.rel (0) target = $region9
    $region8: #{tpu_custom_call.1} parent=1 // pred_region
      %s23 = ssub.s32 16, 16
      %24 = vsyncadd [#allocation5], %s23
      %s26 = sshll.u32 %s1, 4
      %s27 = int_to_ptr.vmem [resolvable:$true] %s26
      %29 = dma.vmem_to_smem %s27, 16, [#allocation6], [#allocation5]
    $region9: #{tpu_custom_call.1} parent=1 // pred_fallthru
      _
    // Predicated region
    $region10: #{tpu_custom_call.1} parent=1 // pred_check
      _
    $region11: #{tpu_custom_call.1} parent=1 // pred_check_branch
      %31 = sbr.rel (0) target = $region13
    $region12: #{tpu_custom_call.1} parent=1 // pred_region
      %32 = dma.done [#allocation3], 256
    $region13: #{tpu_custom_call.1} parent=1 // pred_fallthru
      _
    // Predicated region
    $region14: #{tpu_custom_call.1} parent=1 // pred_check
      _
    $region15: #{tpu_custom_call.1} parent=1 // pred_check_branch
      %34 = sbr.rel (0) target = $region17
    $region16: #{tpu_custom_call.1} parent=1 // pred_region
      %35 = dma.done [#allocation5], 16
    $region17: #{tpu_custom_call.1} parent=1 // pred_fallthru
      _
    %36 = sfence
    %s37 = sld [smem:[#allocation6]]
    %s38 = sld [smem:[#allocation6 + $0x1]]
    %s39 = sld [smem:[#allocation6 + $0x2]]
    %v40 = vld [vmem:[#allocation2] sm:$0xff]
    %v41 = vstv %s37
    %v42 = vmul.f32 %v41, %v40
    %v43 = vld [vmem:[#allocation2] sm:$0xff]
    %v44 = vld [vmem:[#allocation2 + $0x8] sm:$0xff]
    %v45 = vstv %s38
    %v46 = vmul.f32 %v45, %v43
    %v47 = vmul.f32 %v45, %v44
    %50 = vrot.lane.b32.xlu0 %v46, 126
    %v51 = vpop.permute.xlu0 %50
    %52 = vrot.lane.b32.xlu0 %v47, 126
    %v53 = vpop.permute.xlu0 %52
    %vm54 = vcmask 1031168
    %v55 = vsel %vm54, %v51, %v53
    %v57 = vadd.f32 %v42, %v55
    %v58 = vstv %s39
    %v59 = vmul.f32 %v58, %v43
    %v60 = vmul.f32 %v58, %v44
    %63 = vrot.lane.b32.xlu0 %v59, 124
    %v64 = vpop.permute.xlu0 %63
    %65 = vrot.lane.b32.xlu0 %v60, 124
    %v66 = vpop.permute.xlu0 %65
    %vm67 = vcmask 1014784
    %v68 = vsel %vm67, %v64, %v66
    %v70 = vadd.f32 %v57, %v68
    %71 = vst [vmem:[#allocation7] sm:$0xff] %v70
    // Predicated region
    $region18: #{tpu_custom_call.1} parent=1 // pred_check
      _
    $region19: #{tpu_custom_call.1} parent=1 // pred_check_branch
      %73 = sbr.rel (0) target = $region21
    $region20: #{tpu_custom_call.1} parent=1 // pred_region
      %s75 = ssub.s32 128, 128
      %76 = vsyncadd [#allocation4], %s75
      %s78 = sshll.u32 [#allocation7], 4
      %s79 = int_to_ptr.vmem [resolvable:$true] %s78
      %81 = dma.vmem_to_hbm [thread:$0]  %s79, 128, %s2, [#allocation4]
    $region21: #{tpu_custom_call.1} parent=1 // pred_fallthru
      _
    // Predicated region
    $region22: #{tpu_custom_call.1} parent=1 // pred_check
      _
    $region23: #{tpu_custom_call.1} parent=1 // pred_check_branch
      %83 = sbr.rel (0) target = $region25
    $region24: #{tpu_custom_call.1} parent=1 // pred_region
      %84 = dma.done [#allocation4], 128
    $region25: #{tpu_custom_call.1} parent=1 // pred_fallthru
      _
    %85 = vsyncpa [#allocation3], 1
    %86 = vsyncpa [#allocation4], 1
    %87 = vsyncpa [#allocation5], 1

</llo_original>
